<compile_context>
chip_gen: v5e
topology: v5e:2x2
jax: 0.10.0
libtpu: 0.0.40
codegen_flags: <defaults>
</compile_context>

<pallas_src>
import jax
import jax.numpy as jnp
from jax import lax
from jax.experimental import pallas as pl
from jax.experimental.pallas import tpu as pltpu

LATENT_DIM = 32
STATE_DIM = 128
HIDDEN = [16, 32, 64]
BN_EPS = 1e-5
LEAKY_SLOPE = 0.01                                    # nn.LeakyReLU default

# Packed-weight layout: rows = [w_in(16) | w1(32) | w2(64) | w_out(128)],
# columns zero-padded to the widest in_features (64).  All row offsets are
# multiples of 8 so the in-kernel sublane slices are aligned.
_W_ROWS = (HIDDEN[0], HIDDEN[1], HIDDEN[2], STATE_DIM)    # 16, 32, 64, 128
_W_COLS = (LATENT_DIM, HIDDEN[0], HIDDEN[1], HIDDEN[2])   # 32, 16, 32, 64
_W_OFFS = (0, 16, 48, 112)
_WPACK_ROWS = sum(_W_ROWS)                                # 240
_WPACK_COLS = max(_W_COLS)                                # 64

_BN_TOTAL = sum(HIDDEN)                                   # 112
_BN_OFFSETS = (0, HIDDEN[0], HIDDEN[0] + HIDDEN[1])       # 0, 16, 48

_VMEM_LIMIT_BYTES = 32 * 1024 * 1024                      # safe on v5e/v6e/v7x


def _leaky_relu(h):
    return jnp.where(h >= 0, h, LEAKY_SLOPE * h)


def decoder_kernel(x_ref, w_ref, bn_ref, out_ref):
    x = x_ref[...]                                        # (B, latent)
    batch = x.shape[0]
    ones_col = jnp.ones((batch, 1), jnp.float32)          # MXU batch-reduction vector

    def fused_batch_norm(h, layer_idx):
        """Training-mode BatchNorm1d on (features, batch) activations.

        One-pass moments via the MXU (h @ ones keeps the batch reduction off
        the XLU), folded into a single scale/shift so the per-element VPU
        cost is one multiply + one add.
        """
        off, f = _BN_OFFSETS[layer_idx], HIDDEN[layer_idx]
        gamma = bn_ref[off:off + f, :]                              # (F, 1)
        beta = bn_ref[_BN_TOTAL + off:_BN_TOTAL + off + f, :]       # (F, 1)
        inv_n = 1.0 / h.shape[1]                                    # biased batch stats
        s1 = jnp.dot(h, ones_col, preferred_element_type=jnp.float32)      # (F, 1)
        s2 = jnp.dot(h * h, ones_col, preferred_element_type=jnp.float32)  # (F, 1)
        mean = s1 * inv_n
        var = jnp.maximum(s2 * inv_n - mean * mean, 0.0)            # E[h^2]-E[h]^2 >= 0
        scale = gamma * lax.rsqrt(var + BN_EPS)
        shift = beta - mean * scale
        return h * scale + shift

    # Static, aligned views into the packed weight block (PyTorch (out, in) layout).
    w_in = w_ref[_W_OFFS[0]:_W_OFFS[0] + _W_ROWS[0], 0:_W_COLS[0]]   # (16, 32)
    w1 = w_ref[_W_OFFS[1]:_W_OFFS[1] + _W_ROWS[1], 0:_W_COLS[1]]     # (32, 16)
    w2 = w_ref[_W_OFFS[2]:_W_OFFS[2] + _W_ROWS[2], 0:_W_COLS[2]]     # (64, 32)
    w_out = w_ref[_W_OFFS[3]:_W_OFFS[3] + _W_ROWS[3], 0:_W_COLS[3]]  # (128, 64)

    # dense_in: (16, 32) contracted with (B, 32) on the feature axis -> (16, B);
    # activations stay in (features, batch) layout until the last layer.
    h = lax.dot_general(w_in, x, (((1,), (1,)), ((), ())),
                        preferred_element_type=jnp.float32)
    h = fused_batch_norm(_leaky_relu(h), 0)

    # hidden layer 0: 16 -> 32
    h = jnp.dot(w1, h, preferred_element_type=jnp.float32)
    h = fused_batch_norm(_leaky_relu(h), 1)

    # hidden layer 1: 32 -> 64
    h = jnp.dot(w2, h, preferred_element_type=jnp.float32)
    h = fused_batch_norm(_leaky_relu(h), 2)

    # dense_out: contract the 64-feature axis of h (64, B) with w_out (128, 64)
    # and emit (B, state_dim) directly -> lane-dense (width-128) output store,
    # no wrapper-side transpose needed.
    out = lax.dot_general(h, w_out, (((0,), (1,)), ((), ())),
                          preferred_element_type=jnp.float32)
    out_ref[...] = out.astype(out_ref.dtype)


def _vmem_bytes_estimate(batch):
    acts = batch * (LATENT_DIM + 2 * sum(HIDDEN) + 2 * STATE_DIM) * 4
    # (·, 1) columns pad to a full 128-lane tile in VMEM.
    weights = (_WPACK_ROWS * _WPACK_COLS + 2 * _BN_TOTAL * 128) * 4
    return acts + weights


def decoder_forward(x, pars, packed_params):
    """x: (B, latent_dim) f32.  pars: unused (API parity with the PyTorch forward)."""
    del pars  # unused, as in the reference forward
    B = x.shape[0]
    # Everything (inputs, intermediates, output) is untiled and VMEM-resident;
    # BatchNorm needs whole-batch statistics, so enforce the ceiling explicitly.
    assert 2 * _vmem_bytes_estimate(B) < _VMEM_LIMIT_BYTES, (
        "batch too large for the untiled kernel; batch tiling with two-phase "
        "BatchNorm statistics would be required")

    vmem = pl.BlockSpec(memory_space=pltpu.MemorySpace.VMEM)
    return pl.pallas_call(
        decoder_kernel,
        out_shape=jax.ShapeDtypeStruct((B, STATE_DIM), jnp.float32),
        in_specs=[vmem, vmem, vmem],
        out_specs=vmem,
        compiler_params=pltpu.CompilerParams(vmem_limit_bytes=_VMEM_LIMIT_BYTES),
    )(x, packed_params["w_packed"], packed_params["bn_packed"])


def init_params(key):
    """Deterministic synthetic init. Weights in PyTorch (out, in) layout."""
    ks = jax.random.split(key, 4)

    def w(k, fan_out, fan_in):
        bound = 1.0 / jnp.sqrt(fan_in)
        return jax.random.uniform(k, (fan_out, fan_in), jnp.float32,
                                  minval=-bound, maxval=bound)

    return {
        "w_in": w(ks[0], HIDDEN[0], LATENT_DIM),
        "w1": w(ks[1], HIDDEN[1], HIDDEN[0]),
        "w2": w(ks[2], HIDDEN[2], HIDDEN[1]),
        "w_out": w(ks[3], STATE_DIM, HIDDEN[2]),
        # BatchNorm affine params as (sum(hidden), 1) columns (torch defaults:
        # weight=1, bias=0); the column layout broadcasts along the lane
        # (batch) axis inside the kernel.
        "bn_gamma": jnp.ones((_BN_TOTAL, 1), jnp.float32),
        "bn_beta": jnp.zeros((_BN_TOTAL, 1), jnp.float32),
    }


def pack_params(params):
    """One-time packing: 4 weights -> one (240, 64) block, gamma/beta -> (224, 1)."""
    def pad_cols(w):
        return jnp.pad(w, ((0, 0), (0, _WPACK_COLS - w.shape[1])))

    w_packed = jnp.concatenate(
        [pad_cols(params["w_in"]), pad_cols(params["w1"]),
         pad_cols(params["w2"]), pad_cols(params["w_out"])], axis=0)
    bn_packed = jnp.concatenate([params["bn_gamma"], params["bn_beta"]], axis=0)
    assert w_packed.shape == (_WPACK_ROWS, _WPACK_COLS)
    assert bn_packed.shape == (2 * _BN_TOTAL, 1)
    return {"w_packed": w_packed, "bn_packed": bn_packed}


def decoder_reference(x, params):
    """Pure-JAX reference in conventional (batch, features) layout."""
    def bn(h, gamma, beta):
        mean = jnp.mean(h, axis=0, keepdims=True)
        var = jnp.mean((h - mean) ** 2, axis=0, keepdims=True)
        return (h - mean) / jnp.sqrt(var + BN_EPS) * gamma + beta

    o0, o1, o2 = _BN_OFFSETS
    f0, f1, f2 = HIDDEN
    g, b = params["bn_gamma"][:, 0], params["bn_beta"][:, 0]
    h = bn(_leaky_relu(x @ params["w_in"].T), g[o0:o0 + f0], b[o0:o0 + f0])
    h = bn(_leaky_relu(h @ params["w1"].T), g[o1:o1 + f1], b[o1:o1 + f1])
    h = bn(_leaky_relu(h @ params["w2"].T), g[o2:o2 + f2], b[o2:o2 + f2])
    return h @ params["w_out"].T


if __name__ == "__main__":
    key = jax.random.PRNGKey(0)
    k_x, k_p, k_params = jax.random.split(key, 3)

    B = 8
    x = jax.random.normal(k_x, (B, LATENT_DIM), jnp.float32)
    pars = jax.random.normal(k_p, (B, 4), jnp.float32)   # unused by forward
    params = init_params(k_params)
    packed = pack_params(params)

    out = jax.block_until_ready(decoder_forward(x, pars, packed))
    ref = decoder_reference(x, params)

    assert out.shape == (B, STATE_DIM)
    assert jnp.allclose(out, ref, atol=1e-3, rtol=1e-3), (
        float(jnp.max(jnp.abs(out - ref))))

    print("KERNEL_OK")
</pallas_src>

<mosaic_0001>
module attributes {stable_mosaic.version = 11 : i64} {
  func.func @decoder_kernel(%arg0: memref<8x32xf32, #tpu.memory_space<vmem>>, %arg1: memref<240x64xf32, #tpu.memory_space<vmem>>, %arg2: memref<224x1xf32, #tpu.memory_space<vmem>>, %arg3: memref<8x128xf32, #tpu.memory_space<vmem>>) attributes {dimension_semantics = [], scalar_prefetch = 0 : i64, scratch_operands = 0 : i64, tpu.core_type = #tpu.core_type<tc>} {
    %c0 = arith.constant 0 : index
    %c0_0 = arith.constant 0 : index
    %0 = vector.load %arg0[%c0, %c0_0] : memref<8x32xf32, #tpu.memory_space<vmem>>, vector<8x32xf32>
    %cst = arith.constant 1.000000e+00 : f32
    %1 = vector.broadcast %cst : f32 to vector<8x1xf32>
    %c0_1 = arith.constant 0 : index
    %c0_2 = arith.constant 0 : index
    %2 = vector.load %arg1[%c0_1, %c0_2] : memref<240x64xf32, #tpu.memory_space<vmem>>, vector<16x32xf32>
    %c16 = arith.constant 16 : index
    %c0_3 = arith.constant 0 : index
    %3 = vector.load %arg1[%c16, %c0_3] : memref<240x64xf32, #tpu.memory_space<vmem>>, vector<32x16xf32>
    %c48 = arith.constant 48 : index
    %c0_4 = arith.constant 0 : index
    %4 = vector.load %arg1[%c48, %c0_4] : memref<240x64xf32, #tpu.memory_space<vmem>>, vector<64x32xf32>
    %c112 = arith.constant 112 : index
    %c0_5 = arith.constant 0 : index
    %5 = vector.load %arg1[%c112, %c0_5] : memref<240x64xf32, #tpu.memory_space<vmem>>, vector<128x64xf32>
    %cst_6 = arith.constant dense<0.000000e+00> : vector<16x8xf32>
    %6 = tpu.matmul %2, %0, %cst_6 {dimension_numbers = #tpu.dot_dimension_numbers<[1], [1], [0], [0], [0, 0, 1, 0], [], []>} : vector<16x32xf32>, vector<8x32xf32>, vector<16x8xf32> -> vector<16x8xf32>
    %cst_7 = arith.constant 0.000000e+00 : f32
    %7 = vector.broadcast %cst_7 : f32 to vector<16x8xf32>
    %8 = arith.cmpf oge, %6, %7 : vector<16x8xf32>
    %cst_8 = arith.constant 0.00999999977 : f32
    %9 = vector.broadcast %cst_8 : f32 to vector<16x8xf32>
    %10 = arith.mulf %9, %6 : vector<16x8xf32>
    %11 = arith.select %8, %6, %10 : vector<16x8xi1>, vector<16x8xf32>
    %c0_9 = arith.constant 0 : index
    %c0_10 = arith.constant 0 : index
    %12 = vector.load %arg2[%c0_9, %c0_10] : memref<224x1xf32, #tpu.memory_space<vmem>>, vector<16x1xf32>
    %c112_11 = arith.constant 112 : index
    %c0_12 = arith.constant 0 : index
    %13 = vector.load %arg2[%c112_11, %c0_12] : memref<224x1xf32, #tpu.memory_space<vmem>>, vector<16x1xf32>
    %cst_13 = arith.constant dense<0.000000e+00> : vector<16x1xf32>
    %14 = tpu.matmul %11, %1, %cst_13 {dimension_numbers = #tpu.dot_dimension_numbers<[1], [0], [0], [1], [0, 0, 1, 1], [], []>} : vector<16x8xf32>, vector<8x1xf32>, vector<16x1xf32> -> vector<16x1xf32>
    %15 = arith.mulf %11, %11 : vector<16x8xf32>
    %cst_14 = arith.constant dense<0.000000e+00> : vector<16x1xf32>
    %16 = tpu.matmul %15, %1, %cst_14 {dimension_numbers = #tpu.dot_dimension_numbers<[1], [0], [0], [1], [0, 0, 1, 1], [], []>} : vector<16x8xf32>, vector<8x1xf32>, vector<16x1xf32> -> vector<16x1xf32>
    %cst_15 = arith.constant 1.250000e-01 : f32
    %17 = vector.broadcast %cst_15 : f32 to vector<16x1xf32>
    %18 = arith.mulf %14, %17 : vector<16x1xf32>
    %cst_16 = arith.constant 1.250000e-01 : f32
    %19 = vector.broadcast %cst_16 : f32 to vector<16x1xf32>
    %20 = arith.mulf %16, %19 : vector<16x1xf32>
    %21 = arith.mulf %18, %18 : vector<16x1xf32>
    %22 = arith.subf %20, %21 : vector<16x1xf32>
    %cst_17 = arith.constant 0.000000e+00 : f32
    %23 = vector.broadcast %cst_17 : f32 to vector<16x1xf32>
    %24 = arith.maximumf %22, %23 : vector<16x1xf32>
    %cst_18 = arith.constant 9.99999974E-6 : f32
    %25 = vector.broadcast %cst_18 : f32 to vector<16x1xf32>
    %26 = arith.addf %24, %25 : vector<16x1xf32>
    %27 = math.rsqrt %26 : vector<16x1xf32>
    %28 = arith.mulf %12, %27 : vector<16x1xf32>
    %29 = arith.mulf %18, %28 : vector<16x1xf32>
    %30 = arith.subf %13, %29 : vector<16x1xf32>
    %31 = vector.broadcast %28 : vector<16x1xf32> to vector<16x8xf32>
    %32 = arith.mulf %11, %31 : vector<16x8xf32>
    %33 = vector.broadcast %30 : vector<16x1xf32> to vector<16x8xf32>
    %34 = arith.addf %32, %33 : vector<16x8xf32>
    %cst_19 = arith.constant dense<0.000000e+00> : vector<32x8xf32>
    %35 = tpu.matmul %3, %34, %cst_19 {dimension_numbers = #tpu.dot_dimension_numbers<[1], [0], [0], [1], [0, 0, 1, 1], [], []>} : vector<32x16xf32>, vector<16x8xf32>, vector<32x8xf32> -> vector<32x8xf32>
    %cst_20 = arith.constant 0.000000e+00 : f32
    %36 = vector.broadcast %cst_20 : f32 to vector<32x8xf32>
    %37 = arith.cmpf oge, %35, %36 : vector<32x8xf32>
    %cst_21 = arith.constant 0.00999999977 : f32
    %38 = vector.broadcast %cst_21 : f32 to vector<32x8xf32>
    %39 = arith.mulf %38, %35 : vector<32x8xf32>
    %40 = arith.select %37, %35, %39 : vector<32x8xi1>, vector<32x8xf32>
    %c16_22 = arith.constant 16 : index
    %c0_23 = arith.constant 0 : index
    %41 = vector.load %arg2[%c16_22, %c0_23] : memref<224x1xf32, #tpu.memory_space<vmem>>, vector<32x1xf32>
    %c128 = arith.constant 128 : index
    %c0_24 = arith.constant 0 : index
    %42 = vector.load %arg2[%c128, %c0_24] : memref<224x1xf32, #tpu.memory_space<vmem>>, vector<32x1xf32>
    %cst_25 = arith.constant dense<0.000000e+00> : vector<32x1xf32>
    %43 = tpu.matmul %40, %1, %cst_25 {dimension_numbers = #tpu.dot_dimension_numbers<[1], [0], [0], [1], [0, 0, 1, 1], [], []>} : vector<32x8xf32>, vector<8x1xf32>, vector<32x1xf32> -> vector<32x1xf32>
    %44 = arith.mulf %40, %40 : vector<32x8xf32>
    %cst_26 = arith.constant dense<0.000000e+00> : vector<32x1xf32>
    %45 = tpu.matmul %44, %1, %cst_26 {dimension_numbers = #tpu.dot_dimension_numbers<[1], [0], [0], [1], [0, 0, 1, 1], [], []>} : vector<32x8xf32>, vector<8x1xf32>, vector<32x1xf32> -> vector<32x1xf32>
    %cst_27 = arith.constant 1.250000e-01 : f32
    %46 = vector.broadcast %cst_27 : f32 to vector<32x1xf32>
    %47 = arith.mulf %43, %46 : vector<32x1xf32>
    %cst_28 = arith.constant 1.250000e-01 : f32
    %48 = vector.broadcast %cst_28 : f32 to vector<32x1xf32>
    %49 = arith.mulf %45, %48 : vector<32x1xf32>
    %50 = arith.mulf %47, %47 : vector<32x1xf32>
    %51 = arith.subf %49, %50 : vector<32x1xf32>
    %cst_29 = arith.constant 0.000000e+00 : f32
    %52 = vector.broadcast %cst_29 : f32 to vector<32x1xf32>
    %53 = arith.maximumf %51, %52 : vector<32x1xf32>
    %cst_30 = arith.constant 9.99999974E-6 : f32
    %54 = vector.broadcast %cst_30 : f32 to vector<32x1xf32>
    %55 = arith.addf %53, %54 : vector<32x1xf32>
    %56 = math.rsqrt %55 : vector<32x1xf32>
    %57 = arith.mulf %41, %56 : vector<32x1xf32>
    %58 = arith.mulf %47, %57 : vector<32x1xf32>
    %59 = arith.subf %42, %58 : vector<32x1xf32>
    %60 = vector.broadcast %57 : vector<32x1xf32> to vector<32x8xf32>
    %61 = arith.mulf %40, %60 : vector<32x8xf32>
    %62 = vector.broadcast %59 : vector<32x1xf32> to vector<32x8xf32>
    %63 = arith.addf %61, %62 : vector<32x8xf32>
    %cst_31 = arith.constant dense<0.000000e+00> : vector<64x8xf32>
    %64 = tpu.matmul %4, %63, %cst_31 {dimension_numbers = #tpu.dot_dimension_numbers<[1], [0], [0], [1], [0, 0, 1, 1], [], []>} : vector<64x32xf32>, vector<32x8xf32>, vector<64x8xf32> -> vector<64x8xf32>
    %cst_32 = arith.constant 0.000000e+00 : f32
    %65 = vector.broadcast %cst_32 : f32 to vector<64x8xf32>
    %66 = arith.cmpf oge, %64, %65 : vector<64x8xf32>
    %cst_33 = arith.constant 0.00999999977 : f32
    %67 = vector.broadcast %cst_33 : f32 to vector<64x8xf32>
    %68 = arith.mulf %67, %64 : vector<64x8xf32>
    %69 = arith.select %66, %64, %68 : vector<64x8xi1>, vector<64x8xf32>
    %c48_34 = arith.constant 48 : index
    %c0_35 = arith.constant 0 : index
    %70 = vector.load %arg2[%c48_34, %c0_35] : memref<224x1xf32, #tpu.memory_space<vmem>>, vector<64x1xf32>
    %c160 = arith.constant 160 : index
    %c0_36 = arith.constant 0 : index
    %71 = vector.load %arg2[%c160, %c0_36] : memref<224x1xf32, #tpu.memory_space<vmem>>, vector<64x1xf32>
    %cst_37 = arith.constant dense<0.000000e+00> : vector<64x1xf32>
    %72 = tpu.matmul %69, %1, %cst_37 {dimension_numbers = #tpu.dot_dimension_numbers<[1], [0], [0], [1], [0, 0, 1, 1], [], []>} : vector<64x8xf32>, vector<8x1xf32>, vector<64x1xf32> -> vector<64x1xf32>
    %73 = arith.mulf %69, %69 : vector<64x8xf32>
    %cst_38 = arith.constant dense<0.000000e+00> : vector<64x1xf32>
    %74 = tpu.matmul %73, %1, %cst_38 {dimension_numbers = #tpu.dot_dimension_numbers<[1], [0], [0], [1], [0, 0, 1, 1], [], []>} : vector<64x8xf32>, vector<8x1xf32>, vector<64x1xf32> -> vector<64x1xf32>
    %cst_39 = arith.constant 1.250000e-01 : f32
    %75 = vector.broadcast %cst_39 : f32 to vector<64x1xf32>
    %76 = arith.mulf %72, %75 : vector<64x1xf32>
    %cst_40 = arith.constant 1.250000e-01 : f32
    %77 = vector.broadcast %cst_40 : f32 to vector<64x1xf32>
    %78 = arith.mulf %74, %77 : vector<64x1xf32>
    %79 = arith.mulf %76, %76 : vector<64x1xf32>
    %80 = arith.subf %78, %79 : vector<64x1xf32>
    %cst_41 = arith.constant 0.000000e+00 : f32
    %81 = vector.broadcast %cst_41 : f32 to vector<64x1xf32>
    %82 = arith.maximumf %80, %81 : vector<64x1xf32>
    %cst_42 = arith.constant 9.99999974E-6 : f32
    %83 = vector.broadcast %cst_42 : f32 to vector<64x1xf32>
    %84 = arith.addf %82, %83 : vector<64x1xf32>
    %85 = math.rsqrt %84 : vector<64x1xf32>
    %86 = arith.mulf %70, %85 : vector<64x1xf32>
    %87 = arith.mulf %76, %86 : vector<64x1xf32>
    %88 = arith.subf %71, %87 : vector<64x1xf32>
    %89 = vector.broadcast %86 : vector<64x1xf32> to vector<64x8xf32>
    %90 = arith.mulf %69, %89 : vector<64x8xf32>
    %91 = vector.broadcast %88 : vector<64x1xf32> to vector<64x8xf32>
    %92 = arith.addf %90, %91 : vector<64x8xf32>
    %cst_43 = arith.constant dense<0.000000e+00> : vector<8x128xf32>
    %93 = tpu.matmul %92, %5, %cst_43 {dimension_numbers = #tpu.dot_dimension_numbers<[0], [1], [1], [0], [0, 1, 1, 0], [], []>} : vector<64x8xf32>, vector<128x64xf32>, vector<8x128xf32> -> vector<8x128xf32>
    %c0_44 = arith.constant 0 : index
    %c0_45 = arith.constant 0 : index
    %94 = vector.load %arg3[%c0_44, %c0_45] : memref<8x128xf32, #tpu.memory_space<vmem>>, vector<8x128xf32>
    tpu.vector_store %arg3[%c0_44, %c0_45], %93 {strides = array<i32>} : memref<8x128xf32, #tpu.memory_space<vmem>>, vector<8x128xf32>,
    return
  }
}

</mosaic_0001>

<llo_original>
// kernel: tpu_custom_call.1
$region0: #{tpu_custom_call.1}
  #allocation0 [shape = 'u32[]', space=smem, size = 0x4, offset = 0x4, fixed_abs, tag = 'smem constant byte address 0x4 - core index']
  #allocation1 [shape = 'u32[72,128]{1,0:T(1,128)}', space=vmem, size = 0x9000, scoped, tag = 'internal scratch']
  %s0 = inlined_call_operand.vmem [shape: f32[8,32], index: 0, kind: input, shape index: {}]
  %s1 = inlined_call_operand.vmem [shape: f32[240,64], index: 1, kind: input, shape index: {}]
  %s2 = inlined_call_operand.vmem [shape: f32[224,1], index: 2, kind: input, shape index: {}]
  %s3 = inlined_call_operand.hbm [shape: f32[8,128], index: 3, kind: output, shape index: {}]
  %s4 = sld [smem:[#allocation0]]
  $region22: #{tpu_custom_call.1} parent=0
    _
  %s6 = ssub.s32 1, %s4
  %s7 = scalar_select 0, %s6, %s4
  $region1: #{tpu_custom_call.1} parent=0
    #allocation2 [shape = 'u8[4096]{0}', space=vmem, size = 0x1000, scoped, tag = 'output window, operand 0, single buffered']
    #allocation3 [shape = 's32[1]{0}', space=sflag, size = 0x4, scoped, tag = 'scoped memory for tpu_custom_call.1']
    %8 = vsyncpa [#allocation3], 0
    // Predicated region
    $region2: #{tpu_custom_call.1} parent=1 // pred_check
      _
    $region3: #{tpu_custom_call.1} parent=1 // pred_check_branch
      %10 = sbr.rel (0) target = $region5
    $region4: #{tpu_custom_call.1} parent=1 // pred_region
      _
    $region5: #{tpu_custom_call.1} parent=1 // pred_fallthru
      _
    // Predicated region
    $region6: #{tpu_custom_call.1} parent=1 // pred_check
      _
    $region7: #{tpu_custom_call.1} parent=1 // pred_check_branch
      %12 = sbr.rel (0) target = $region9
    $region8: #{tpu_custom_call.1} parent=1 // pred_region
      _
    $region9: #{tpu_custom_call.1} parent=1 // pred_fallthru
      _
    // Predicated region
    $region10: #{tpu_custom_call.1} parent=1 // pred_check
      _
    $region11: #{tpu_custom_call.1} parent=1 // pred_check_branch
      %14 = sbr.rel (0) target = $region13
    $region12: #{tpu_custom_call.1} parent=1 // pred_region
      _
    $region13: #{tpu_custom_call.1} parent=1 // pred_fallthru
      _
    %v15 = vld [vmem:[%s0] sm:$0xff]
    %v16 = vld [vmem:[%s1] sm:$0xff]
    %v17 = vld [vmem:[%s1 + $0x8] sm:$0xff]
    %v18 = vld [vmem:[%s1 + $0x10] sm:$0xff]
    %v19 = vld [vmem:[%s1 + $0x18] sm:$0xff]
    %v20 = vld [vmem:[%s1 + $0x20] sm:$0xff]
    %v21 = vld [vmem:[%s1 + $0x28] sm:$0xff]
    %v22 = vld [vmem:[%s1 + $0x30] sm:$0xff]
    %v23 = vld [vmem:[%s1 + $0x38] sm:$0xff]
    %v24 = vld [vmem:[%s1 + $0x40] sm:$0xff]
    %v25 = vld [vmem:[%s1 + $0x48] sm:$0xff]
    %v26 = vld [vmem:[%s1 + $0x50] sm:$0xff]
    %v27 = vld [vmem:[%s1 + $0x58] sm:$0xff]
    %v28 = vld [vmem:[%s1 + $0x60] sm:$0xff]
    %v29 = vld [vmem:[%s1 + $0x68] sm:$0xff]
    %v30 = vld [vmem:[%s1 + $0x70] sm:$0xff]
    %v31 = vld [vmem:[%s1 + $0x78] sm:$0xff]
    %v32 = vld [vmem:[%s1 + $0x80] sm:$0xff]
    %v33 = vld [vmem:[%s1 + $0x88] sm:$0xff]
    %v34 = vld [vmem:[%s1 + $0x90] sm:$0xff]
    %v35 = vld [vmem:[%s1 + $0x98] sm:$0xff]
    %v36 = vld [vmem:[%s1 + $0xa0] sm:$0xff]
    %v37 = vld [vmem:[%s1 + $0xa8] sm:$0xff]
    %v38 = vld [vmem:[%s1 + $0xb0] sm:$0xff]
    %v39 = vld [vmem:[%s1 + $0xb8] sm:$0xff]
    %v40 = vld [vmem:[%s1 + $0xc0] sm:$0xff]
    %v41 = vld [vmem:[%s1 + $0xc8] sm:$0xff]
    %v42 = vld [vmem:[%s1 + $0xd0] sm:$0xff]
    %v43 = vld [vmem:[%s1 + $0xd8] sm:$0xff]
    %v44 = vld [vmem:[%s1 + $0xe0] sm:$0xff]
    %v45 = vld [vmem:[%s1 + $0xe8] sm:$0xff]
    %vm46 = vcmask 261120
    %v48 = vsel %vm46, %v16, 0
    %v51 = vsel %vm46, %v17, 0
    %v54 = vsel %vm46, %v15, 0
    %56 = vmatpush.xpose.msra.mxu0 0.0
    %57 = vmatpush.xpose.msra.mxu0 0.0
    %58 = vmatpush.xpose.msra.mxu0 0.0
    %59 = vmatpush.xpose.msra.mxu0 0.0
    %60 = vmatpush.xpose.msra.mxu0 0.0
    %61 = vmatpush.xpose.msra.mxu0 0.0
    %62 = vmatpush.xpose.msra.mxu0 0.0
    %63 = vmatpush.xpose.msra.mxu0 0.0
    %64 = vmatpush.xpose.msra.mxu0 0.0
    %65 = vmatpush.xpose.msra.mxu0 0.0
    %66 = vmatpush.xpose.msra.mxu0 0.0
    %67 = vmatpush.xpose.msra.mxu0 0.0
    %68 = vmatpush.xpose.msra.mxu0 0.0
    %69 = vmatpush.xpose.msra.mxu0 0.0
    %70 = vmatpush.xpose.msra.mxu0 0.0
    %71 = vmatpush.xpose.msra.mxu0 %v54
    %72 = vmatmul.f32.gmra.mxu0 %v48
    %v73 = vpop.f32.mrf.mxu0
    %v74 = vadd.f32 0.0, %v73
    %75 = vmatmul.f32.gmra.mxu0 %v51
    %v76 = vpop.f32.mrf.mxu0
    %v77 = vadd.f32 0.0, %v76
    %78 = vdwg.mxu0
    %vm79 = vcmp.ge.f32.partialorder %v74, 0.0
    %vm80 = vcmp.ge.f32.partialorder %v77, 0.0
    %v81 = vmul.f32 %v74, 0.01
    %v82 = vmul.f32 %v77, 0.01
    %v83 = vsel %vm79, %v74, %v81
    %v84 = vsel %vm80, %v77, %v82
    %v85 = vld [vmem:[%s2] sm:$0xff]
    %v86 = vld [vmem:[%s2 + $0x8] sm:$0xff]
    %v87 = vld [vmem:[%s2 + $0x70] sm:$0xff]
    %v88 = vld [vmem:[%s2 + $0x78] sm:$0xff]
    %vm89 = vcmask 64512
    %v91 = vsel %vm89, %v83, 0
    %v94 = vsel %vm89, %v84, 0
    %96 = vmatpush.msra.mxu0 0.0
    %97 = vmatpush.msra.mxu0 0.0
    %98 = vmatpush.msra.mxu0 0.0
    %99 = vmatpush.msra.mxu0 0.0
    %100 = vmatpush.msra.mxu0 0.0
    %101 = vmatpush.msra.mxu0 0.0
    %102 = vmatpush.msra.mxu0 0.0
    %103 = vmatpush.msra.mxu0 0.0
    %104 = vmatpush.msra.mxu0 0.0
    %105 = vmatpush.msra.mxu0 0.0
    %106 = vmatpush.msra.mxu0 0.0
    %107 = vmatpush.msra.mxu0 0.0
    %108 = vmatpush.msra.mxu0 0.0
    %109 = vmatpush.msra.mxu0 0.0
    %110 = vmatpush.msra.mxu0 0.0
    %111 = vmatpush.msra.mxu0 1.0
    %112 = vmatmul.f32.gmra.mxu0 %v91
    %v113 = vpop.f32.mrf.mxu0
    %v114 = vadd.f32 0.0, %v113
    %115 = vmatmul.f32.gmra.mxu0 %v94
    %v116 = vpop.f32.mrf.mxu0
    %v117 = vadd.f32 0.0, %v116
    %118 = vdwg.mxu0
    %v119 = vmul.f32 %v83, %v83
    %v120 = vmul.f32 %v84, %v84
    %v122 = vsel %vm89, %v119, 0
    %v125 = vsel %vm89, %v120, 0
    %127 = vmatpush.msra.mxu0 0.0
    %128 = vmatpush.msra.mxu0 0.0
    %129 = vmatpush.msra.mxu0 0.0
    %130 = vmatpush.msra.mxu0 0.0
    %131 = vmatpush.msra.mxu0 0.0
    %132 = vmatpush.msra.mxu0 0.0
    %133 = vmatpush.msra.mxu0 0.0
    %134 = vmatpush.msra.mxu0 0.0
    %135 = vmatpush.msra.mxu0 0.0
    %136 = vmatpush.msra.mxu0 0.0
    %137 = vmatpush.msra.mxu0 0.0
    %138 = vmatpush.msra.mxu0 0.0
    %139 = vmatpush.msra.mxu0 0.0
    %140 = vmatpush.msra.mxu0 0.0
    %141 = vmatpush.msra.mxu0 0.0
    %142 = vmatpush.msra.mxu0 1.0
    %143 = vmatmul.f32.gmra.mxu0 %v122
    %v144 = vpop.f32.mrf.mxu0
    %v145 = vadd.f32 0.0, %v144
    %146 = vmatmul.f32.gmra.mxu0 %v125
    %v147 = vpop.f32.mrf.mxu0
    %v148 = vadd.f32 0.0, %v147
    %149 = vdwg.mxu0
    %v150 = vmul.f32 %v114, 0.125
    %v151 = vmul.f32 %v117, 0.125
    %v152 = vmul.f32 %v145, 0.125
    %v153 = vmul.f32 %v148, 0.125
    %v154 = vmul.f32 %v150, %v150
    %v155 = vmul.f32 %v151, %v151
    %v156 = vsub.f32 %v152, %v154
    %v157 = vsub.f32 %v153, %v155
    %v158 = vmax.f32 %v156, 0.0
    %v159 = vmax.f32 %v157, 0.0
    %v160 = vadd.f32 %v158, 1e-05
    %v161 = vadd.f32 %v159, 1e-05
    %v162 = vrsqrt.pop %v160
    %v163 = vmul.f32 %v162, %v160
    %v164 = vmul.f32 %v163, %v162
    %v165 = vmul.f32 0.5, %v164
    %v166 = vsub.f32 1.5, %v165
    %v167 = vmul.f32 %v162, %v166
    %vm168 = vweird.f32 %v160
    %vm169 = vweird.f32 %v162
    %vm170 = vmor %vm168, %vm169
    %v171 = vsel %vm170, %v162, %v167
    %v172 = vrsqrt.pop %v161
    %v173 = vmul.f32 %v172, %v161
    %v174 = vmul.f32 %v173, %v172
    %v175 = vmul.f32 0.5, %v174
    %v176 = vsub.f32 1.5, %v175
    %v177 = vmul.f32 %v172, %v176
    %vm178 = vweird.f32 %v161
    %vm179 = vweird.f32 %v172
    %vm180 = vmor %vm178, %vm179
    %v181 = vsel %vm180, %v172, %v177
    %v182 = vmul.f32 %v85, %v171
    %v183 = vmul.f32 %v86, %v181
    %v184 = vmul.f32 %v150, %v182
    %v185 = vmul.f32 %v151, %v183
    %v186 = vsub.f32 %v87, %v184
    %v187 = vsub.f32 %v88, %v185
    %189 = vset.pattern.permute.xlu0 0
    %190 = vperm.xlu0 %189, %v182
    %v191 = vpop.permute.xlu0 %190
    %194 = vset.pattern.permute.xlu0 0
    %195 = vperm.xlu0 %194, %v183
    %v196 = vpop.permute.xlu0 %195
    %v198 = vmul.f32 %v83, %v191
    %v199 = vmul.f32 %v84, %v196
    %201 = vset.pattern.permute.xlu0 0
    %202 = vperm.xlu0 %201, %v186
    %v203 = vpop.permute.xlu0 %202
    %206 = vset.pattern.permute.xlu0 0
    %207 = vperm.xlu0 %206, %v187
    %v208 = vpop.permute.xlu0 %207
    %v210 = vadd.f32 %v198, %v203
    %v211 = vadd.f32 %v199, %v208
    %vm212 = vcmask 130048
    %v214 = vsel %vm212, %v18, 0
    %v217 = vsel %vm212, %v19, 0
    %v220 = vsel %vm212, %v20, 0
    %v223 = vsel %vm212, %v21, 0
    %225 = vmatpush.msra.mxu0 0.0
    %226 = vmatpush.msra.mxu0 0.0
    %227 = vmatpush.msra.mxu0 0.0
    %228 = vmatpush.msra.mxu0 0.0
    %229 = vmatpush.msra.mxu0 0.0
    %230 = vmatpush.msra.mxu0 0.0
    %231 = vmatpush.msra.mxu0 0.0
    %232 = vmatpush.msra.mxu0 0.0
    %233 = vmatpush.msra.mxu0 0.0
    %234 = vmatpush.msra.mxu0 0.0
    %235 = vmatpush.msra.mxu0 0.0
    %236 = vmatpush.msra.mxu0 0.0
    %237 = vmatpush.msra.mxu0 0.0
    %238 = vmatpush.msra.mxu0 0.0
    %239 = vmatpush.msra.mxu0 %v211
    %240 = vmatpush.msra.mxu0 %v210
    %241 = vmatmul.f32.gmra.mxu0 %v214
    %v242 = vpop.f32.mrf.mxu0
    %v243 = vadd.f32 0.0, %v242
    %244 = vmatmul.f32.gmra.mxu0 %v217
    %v245 = vpop.f32.mrf.mxu0
    %v246 = vadd.f32 0.0, %v245
    %247 = vmatmul.f32.gmra.mxu0 %v220
    %v248 = vpop.f32.mrf.mxu0
    %v249 = vadd.f32 0.0, %v248
    %250 = vmatmul.f32.gmra.mxu0 %v223
    %v251 = vpop.f32.mrf.mxu0
    %v252 = vadd.f32 0.0, %v251
    %253 = vdwg.mxu0
    %vm254 = vcmp.ge.f32.partialorder %v243, 0.0
    %vm255 = vcmp.ge.f32.partialorder %v246, 0.0
    %vm256 = vcmp.ge.f32.partialorder %v249, 0.0
    %vm257 = vcmp.ge.f32.partialorder %v252, 0.0
    %v258 = vmul.f32 %v243, 0.01
    %v259 = vmul.f32 %v246, 0.01
    %v260 = vmul.f32 %v249, 0.01
    %v261 = vmul.f32 %v252, 0.01
    %v262 = vsel %vm254, %v243, %v258
    %v263 = vsel %vm255, %v246, %v259
    %v264 = vsel %vm256, %v249, %v260
    %v265 = vsel %vm257, %v252, %v261
    %v266 = vld [vmem:[%s2 + $0x10] sm:$0xff]
    %v267 = vld [vmem:[%s2 + $0x18] sm:$0xff]
    %v268 = vld [vmem:[%s2 + $0x20] sm:$0xff]
    %v269 = vld [vmem:[%s2 + $0x28] sm:$0xff]
    %v270 = vld [vmem:[%s2 + $0x80] sm:$0xff]
    %v271 = vld [vmem:[%s2 + $0x88] sm:$0xff]
    %v272 = vld [vmem:[%s2 + $0x90] sm:$0xff]
    %v273 = vld [vmem:[%s2 + $0x98] sm:$0xff]
    %v275 = vsel %vm89, %v262, 0
    %v278 = vsel %vm89, %v263, 0
    %v281 = vsel %vm89, %v264, 0
    %v284 = vsel %vm89, %v265, 0
    %286 = vmatpush.msra.mxu0 0.0
    %287 = vmatpush.msra.mxu0 0.0
    %288 = vmatpush.msra.mxu0 0.0
    %289 = vmatpush.msra.mxu0 0.0
    %290 = vmatpush.msra.mxu0 0.0
    %291 = vmatpush.msra.mxu0 0.0
    %292 = vmatpush.msra.mxu0 0.0
    %293 = vmatpush.msra.mxu0 0.0
    %294 = vmatpush.msra.mxu0 0.0
    %295 = vmatpush.msra.mxu0 0.0
    %296 = vmatpush.msra.mxu0 0.0
    %297 = vmatpush.msra.mxu0 0.0
    %298 = vmatpush.msra.mxu0 0.0
    %299 = vmatpush.msra.mxu0 0.0
    %300 = vmatpush.msra.mxu0 0.0
    %301 = vmatpush.msra.mxu0 1.0
    %302 = vmatmul.f32.gmra.mxu0 %v275
    %v303 = vpop.f32.mrf.mxu0
    %v304 = vadd.f32 0.0, %v303
    %305 = vmatmul.f32.gmra.mxu0 %v278
    %v306 = vpop.f32.mrf.mxu0
    %v307 = vadd.f32 0.0, %v306
    %308 = vmatmul.f32.gmra.mxu0 %v281
    %v309 = vpop.f32.mrf.mxu0
    %v310 = vadd.f32 0.0, %v309
    %311 = vmatmul.f32.gmra.mxu0 %v284
    %v312 = vpop.f32.mrf.mxu0
    %v313 = vadd.f32 0.0, %v312
    %314 = vdwg.mxu0
    %v315 = vmul.f32 %v262, %v262
    %v316 = vmul.f32 %v263, %v263
    %v317 = vmul.f32 %v264, %v264
    %v318 = vmul.f32 %v265, %v265
    %v320 = vsel %vm89, %v315, 0
    %v323 = vsel %vm89, %v316, 0
    %v326 = vsel %vm89, %v317, 0
    %v329 = vsel %vm89, %v318, 0
    %331 = vmatpush.msra.mxu0 0.0
    %332 = vmatpush.msra.mxu0 0.0
    %333 = vmatpush.msra.mxu0 0.0
    %334 = vmatpush.msra.mxu0 0.0
    %335 = vmatpush.msra.mxu0 0.0
    %336 = vmatpush.msra.mxu0 0.0
    %337 = vmatpush.msra.mxu0 0.0
    %338 = vmatpush.msra.mxu0 0.0
    %339 = vmatpush.msra.mxu0 0.0
    %340 = vmatpush.msra.mxu0 0.0
    %341 = vmatpush.msra.mxu0 0.0
    %342 = vmatpush.msra.mxu0 0.0
    %343 = vmatpush.msra.mxu0 0.0
    %344 = vmatpush.msra.mxu0 0.0
    %345 = vmatpush.msra.mxu0 0.0
    %346 = vmatpush.msra.mxu0 1.0
    %347 = vmatmul.f32.gmra.mxu0 %v320
    %v348 = vpop.f32.mrf.mxu0
    %v349 = vadd.f32 0.0, %v348
    %350 = vmatmul.f32.gmra.mxu0 %v323
    %v351 = vpop.f32.mrf.mxu0
    %v352 = vadd.f32 0.0, %v351
    %353 = vmatmul.f32.gmra.mxu0 %v326
    %v354 = vpop.f32.mrf.mxu0
    %v355 = vadd.f32 0.0, %v354
    %356 = vmatmul.f32.gmra.mxu0 %v329
    %v357 = vpop.f32.mrf.mxu0
    %v358 = vadd.f32 0.0, %v357
    %359 = vdwg.mxu0
    %v360 = vmul.f32 %v304, 0.125
    %v361 = vmul.f32 %v307, 0.125
    %v362 = vmul.f32 %v310, 0.125
    %v363 = vmul.f32 %v313, 0.125
    %v364 = vmul.f32 %v349, 0.125
    %v365 = vmul.f32 %v352, 0.125
    %v366 = vmul.f32 %v355, 0.125
    %v367 = vmul.f32 %v358, 0.125
    %v368 = vmul.f32 %v360, %v360
    %v369 = vmul.f32 %v361, %v361
    %v370 = vmul.f32 %v362, %v362
    %v371 = vmul.f32 %v363, %v363
    %v372 = vsub.f32 %v364, %v368
    %v373 = vsub.f32 %v365, %v369
    %v374 = vsub.f32 %v366, %v370
    %v375 = vsub.f32 %v367, %v371
    %v376 = vmax.f32 %v372, 0.0
    %v377 = vmax.f32 %v373, 0.0
    %v378 = vmax.f32 %v374, 0.0
    %v379 = vmax.f32 %v375, 0.0
    %v380 = vadd.f32 %v376, 1e-05
    %v381 = vadd.f32 %v377, 1e-05
    %v382 = vadd.f32 %v378, 1e-05
    %v383 = vadd.f32 %v379, 1e-05
    %v384 = vrsqrt.pop %v380
    %v385 = vmul.f32 %v384, %v380
    %v386 = vmul.f32 %v385, %v384
    %v387 = vmul.f32 0.5, %v386
    %v388 = vsub.f32 1.5, %v387
    %v389 = vmul.f32 %v384, %v388
    %vm390 = vweird.f32 %v380
    %vm391 = vweird.f32 %v384
    %vm392 = vmor %vm390, %vm391
    %v393 = vsel %vm392, %v384, %v389
    %v394 = vrsqrt.pop %v381
    %v395 = vmul.f32 %v394, %v381
    %v396 = vmul.f32 %v395, %v394
    %v397 = vmul.f32 0.5, %v396
    %v398 = vsub.f32 1.5, %v397
    %v399 = vmul.f32 %v394, %v398
    %vm400 = vweird.f32 %v381
    %vm401 = vweird.f32 %v394
    %vm402 = vmor %vm400, %vm401
    %v403 = vsel %vm402, %v394, %v399
    %v404 = vrsqrt.pop %v382
    %v405 = vmul.f32 %v404, %v382
    %v406 = vmul.f32 %v405, %v404
    %v407 = vmul.f32 0.5, %v406
    %v408 = vsub.f32 1.5, %v407
    %v409 = vmul.f32 %v404, %v408
    %vm410 = vweird.f32 %v382
    %vm411 = vweird.f32 %v404
    %vm412 = vmor %vm410, %vm411
    %v413 = vsel %vm412, %v404, %v409
    %v414 = vrsqrt.pop %v383
    %v415 = vmul.f32 %v414, %v383
    %v416 = vmul.f32 %v415, %v414
    %v417 = vmul.f32 0.5, %v416
    %v418 = vsub.f32 1.5, %v417
    %v419 = vmul.f32 %v414, %v418
    %vm420 = vweird.f32 %v383
    %vm421 = vweird.f32 %v414
    %vm422 = vmor %vm420, %vm421
    %v423 = vsel %vm422, %v414, %v419
    %v424 = vmul.f32 %v266, %v393
    %v425 = vmul.f32 %v267, %v403
    %v426 = vmul.f32 %v268, %v413
    %v427 = vmul.f32 %v269, %v423
    %v428 = vmul.f32 %v360, %v424
    %v429 = vmul.f32 %v361, %v425
    %v430 = vmul.f32 %v362, %v426
    %v431 = vmul.f32 %v363, %v427
    %v432 = vsub.f32 %v270, %v428
    %v433 = vsub.f32 %v271, %v429
    %v434 = vsub.f32 %v272, %v430
    %v435 = vsub.f32 %v273, %v431
    %437 = vset.pattern.permute.xlu0 0
    %438 = vperm.xlu0 %437, %v424
    %v439 = vpop.permute.xlu0 %438
    %442 = vset.pattern.permute.xlu0 0
    %443 = vperm.xlu0 %442, %v425
    %v444 = vpop.permute.xlu0 %443
    %447 = vset.pattern.permute.xlu0 0
    %448 = vperm.xlu0 %447, %v426
    %v449 = vpop.permute.xlu0 %448
    %452 = vset.pattern.permute.xlu0 0
    %453 = vperm.xlu0 %452, %v427
    %v454 = vpop.permute.xlu0 %453
    %v456 = vmul.f32 %v262, %v439
    %v457 = vmul.f32 %v263, %v444
    %v458 = vmul.f32 %v264, %v449
    %v459 = vmul.f32 %v265, %v454
    %461 = vset.pattern.permute.xlu0 0
    %462 = vperm.xlu0 %461, %v432
    %v463 = vpop.permute.xlu0 %462
    %466 = vset.pattern.permute.xlu0 0
    %467 = vperm.xlu0 %466, %v433
    %v468 = vpop.permute.xlu0 %467
    %471 = vset.pattern.permute.xlu0 0
    %472 = vperm.xlu0 %471, %v434
    %v473 = vpop.permute.xlu0 %472
    %476 = vset.pattern.permute.xlu0 0
    %477 = vperm.xlu0 %476, %v435
    %v478 = vpop.permute.xlu0 %477
    %v480 = vadd.f32 %v456, %v463
    %v481 = vadd.f32 %v457, %v468
    %v482 = vadd.f32 %v458, %v473
    %v483 = vadd.f32 %v459, %v478
    %v485 = vsel %vm46, %v22, 0
    %v488 = vsel %vm46, %v23, 0
    %v491 = vsel %vm46, %v24, 0
    %v494 = vsel %vm46, %v25, 0
    %v497 = vsel %vm46, %v26, 0
    %v500 = vsel %vm46, %v27, 0
    %v503 = vsel %vm46, %v28, 0
    %v506 = vsel %vm46, %v29, 0
    %508 = vmatpush.msra.mxu0 0.0
    %509 = vmatpush.msra.mxu0 0.0
    %510 = vmatpush.msra.mxu0 0.0
    %511 = vmatpush.msra.mxu0 0.0
    %512 = vmatpush.msra.mxu0 0.0
    %513 = vmatpush.msra.mxu0 0.0
    %514 = vmatpush.msra.mxu0 0.0
    %515 = vmatpush.msra.mxu0 0.0
    %516 = vmatpush.msra.mxu0 0.0
    %517 = vmatpush.msra.mxu0 0.0
    %518 = vmatpush.msra.mxu0 0.0
    %519 = vmatpush.msra.mxu0 0.0
    %520 = vmatpush.msra.mxu0 %v483
    %521 = vmatpush.msra.mxu0 %v482
    %522 = vmatpush.msra.mxu0 %v481
    %523 = vmatpush.msra.mxu0 %v480
    %524 = vmatmul.f32.gmra.mxu0 %v485
    %v525 = vpop.f32.mrf.mxu0
    %v526 = vadd.f32 0.0, %v525
    %527 = vmatmul.f32.gmra.mxu0 %v488
    %v528 = vpop.f32.mrf.mxu0
    %v529 = vadd.f32 0.0, %v528
    %530 = vmatmul.f32.gmra.mxu0 %v491
    %v531 = vpop.f32.mrf.mxu0
    %v532 = vadd.f32 0.0, %v531
    %533 = vmatmul.f32.gmra.mxu0 %v494
    %v534 = vpop.f32.mrf.mxu0
    %v535 = vadd.f32 0.0, %v534
    %536 = vmatmul.f32.gmra.mxu0 %v497
    %v537 = vpop.f32.mrf.mxu0
    %v538 = vadd.f32 0.0, %v537
    %539 = vmatmul.f32.gmra.mxu0 %v500
    %v540 = vpop.f32.mrf.mxu0
    %v541 = vadd.f32 0.0, %v540
    %542 = vmatmul.f32.gmra.mxu0 %v503
    %v543 = vpop.f32.mrf.mxu0
    %v544 = vadd.f32 0.0, %v543
    %545 = vmatmul.f32.gmra.mxu0 %v506
    %v546 = vpop.f32.mrf.mxu0
    %v547 = vadd.f32 0.0, %v546
    %548 = vdwg.mxu0
    %vm549 = vcmp.ge.f32.partialorder %v526, 0.0
    %vm550 = vcmp.ge.f32.partialorder %v529, 0.0
    %vm551 = vcmp.ge.f32.partialorder %v532, 0.0
    %vm552 = vcmp.ge.f32.partialorder %v535, 0.0
    %vm553 = vcmp.ge.f32.partialorder %v538, 0.0
    %vm554 = vcmp.ge.f32.partialorder %v541, 0.0
    %vm555 = vcmp.ge.f32.partialorder %v544, 0.0
    %vm556 = vcmp.ge.f32.partialorder %v547, 0.0
    %v557 = vmul.f32 %v526, 0.01
    %v558 = vmul.f32 %v529, 0.01
    %v559 = vmul.f32 %v532, 0.01
    %v560 = vmul.f32 %v535, 0.01
    %v561 = vmul.f32 %v538, 0.01
    %v562 = vmul.f32 %v541, 0.01
    %v563 = vmul.f32 %v544, 0.01
    %v564 = vmul.f32 %v547, 0.01
    %v565 = vsel %vm549, %v526, %v557
    %v566 = vsel %vm550, %v529, %v558
    %v567 = vsel %vm551, %v532, %v559
    %v568 = vsel %vm552, %v535, %v560
    %v569 = vsel %vm553, %v538, %v561
    %v570 = vsel %vm554, %v541, %v562
    %v571 = vsel %vm555, %v544, %v563
    %v572 = vsel %vm556, %v547, %v564
    %v573 = vld [vmem:[%s2 + $0x30] sm:$0xff]
    %v574 = vld [vmem:[%s2 + $0x38] sm:$0xff]
    %v575 = vld [vmem:[%s2 + $0x40] sm:$0xff]
    %v576 = vld [vmem:[%s2 + $0x48] sm:$0xff]
    %v577 = vld [vmem:[%s2 + $0x50] sm:$0xff]
    %v578 = vld [vmem:[%s2 + $0x58] sm:$0xff]
    %v579 = vld [vmem:[%s2 + $0x60] sm:$0xff]
    %v580 = vld [vmem:[%s2 + $0x68] sm:$0xff]
    %v581 = vld [vmem:[%s2 + $0xa0] sm:$0xff]
    %v582 = vld [vmem:[%s2 + $0xa8] sm:$0xff]
    %v583 = vld [vmem:[%s2 + $0xb0] sm:$0xff]
    %v584 = vld [vmem:[%s2 + $0xb8] sm:$0xff]
    %v585 = vld [vmem:[%s2 + $0xc0] sm:$0xff]
    %v586 = vld [vmem:[%s2 + $0xc8] sm:$0xff]
    %v587 = vld [vmem:[%s2 + $0xd0] sm:$0xff]
    %v588 = vld [vmem:[%s2 + $0xd8] sm:$0xff]
    %v590 = vsel %vm89, %v565, 0
    %v593 = vsel %vm89, %v566, 0
    %v596 = vsel %vm89, %v567, 0
    %v599 = vsel %vm89, %v568, 0
    %v602 = vsel %vm89, %v569, 0
    %v605 = vsel %vm89, %v570, 0
    %v608 = vsel %vm89, %v571, 0
    %v611 = vsel %vm89, %v572, 0
    %613 = vmatpush.msra.mxu0 0.0
    %614 = vmatpush.msra.mxu0 0.0
    %615 = vmatpush.msra.mxu0 0.0
    %616 = vmatpush.msra.mxu0 0.0
    %617 = vmatpush.msra.mxu0 0.0
    %618 = vmatpush.msra.mxu0 0.0
    %619 = vmatpush.msra.mxu0 0.0
    %620 = vmatpush.msra.mxu0 0.0
    %621 = vmatpush.msra.mxu0 0.0
    %622 = vmatpush.msra.mxu0 0.0
    %623 = vmatpush.msra.mxu0 0.0
    %624 = vmatpush.msra.mxu0 0.0
    %625 = vmatpush.msra.mxu0 0.0
    %626 = vmatpush.msra.mxu0 0.0
    %627 = vmatpush.msra.mxu0 0.0
    %628 = vmatpush.msra.mxu0 1.0
    %629 = vmatmul.f32.gmra.mxu0 %v590
    %v630 = vpop.f32.mrf.mxu0
    %v631 = vadd.f32 0.0, %v630
    %632 = vmatmul.f32.gmra.mxu0 %v593
    %v633 = vpop.f32.mrf.mxu0
    %v634 = vadd.f32 0.0, %v633
    %635 = vmatmul.f32.gmra.mxu0 %v596
    %v636 = vpop.f32.mrf.mxu0
    %v637 = vadd.f32 0.0, %v636
    %638 = vmatmul.f32.gmra.mxu0 %v599
    %v639 = vpop.f32.mrf.mxu0
    %v640 = vadd.f32 0.0, %v639
    %641 = vmatmul.f32.gmra.mxu0 %v602
    %v642 = vpop.f32.mrf.mxu0
    %v643 = vadd.f32 0.0, %v642
    %644 = vmatmul.f32.gmra.mxu0 %v605
    %v645 = vpop.f32.mrf.mxu0
    %v646 = vadd.f32 0.0, %v645
    %647 = vmatmul.f32.gmra.mxu0 %v608
    %v648 = vpop.f32.mrf.mxu0
    %v649 = vadd.f32 0.0, %v648
    %650 = vmatmul.f32.gmra.mxu0 %v611
    %v651 = vpop.f32.mrf.mxu0
    %v652 = vadd.f32 0.0, %v651
    %653 = vdwg.mxu0
    %v654 = vmul.f32 %v565, %v565
    %v655 = vmul.f32 %v566, %v566
    %v656 = vmul.f32 %v567, %v567
    %v657 = vmul.f32 %v568, %v568
    %v658 = vmul.f32 %v569, %v569
    %v659 = vmul.f32 %v570, %v570
    %v660 = vmul.f32 %v571, %v571
    %v661 = vmul.f32 %v572, %v572
    %v663 = vsel %vm89, %v654, 0
    %v666 = vsel %vm89, %v655, 0
    %v669 = vsel %vm89, %v656, 0
    %v672 = vsel %vm89, %v657, 0
    %v675 = vsel %vm89, %v658, 0
    %v678 = vsel %vm89, %v659, 0
    %v681 = vsel %vm89, %v660, 0
    %v684 = vsel %vm89, %v661, 0
    %686 = vmatpush.msra.mxu0 0.0
    %687 = vmatpush.msra.mxu0 0.0
    %688 = vmatpush.msra.mxu0 0.0
    %689 = vmatpush.msra.mxu0 0.0
    %690 = vmatpush.msra.mxu0 0.0
    %691 = vmatpush.msra.mxu0 0.0
    %692 = vmatpush.msra.mxu0 0.0
    %693 = vmatpush.msra.mxu0 0.0
    %694 = vmatpush.msra.mxu0 0.0
    %695 = vmatpush.msra.mxu0 0.0
    %696 = vmatpush.msra.mxu0 0.0
    %697 = vmatpush.msra.mxu0 0.0
    %698 = vmatpush.msra.mxu0 0.0
    %699 = vmatpush.msra.mxu0 0.0
    %700 = vmatpush.msra.mxu0 0.0
    %701 = vmatpush.msra.mxu0 1.0
    %702 = vmatmul.f32.gmra.mxu0 %v663
    %v703 = vpop.f32.mrf.mxu0
    %v704 = vadd.f32 0.0, %v703
    %705 = vmatmul.f32.gmra.mxu0 %v666
    %v706 = vpop.f32.mrf.mxu0
    %v707 = vadd.f32 0.0, %v706
    %708 = vmatmul.f32.gmra.mxu0 %v669
    %v709 = vpop.f32.mrf.mxu0
    %v710 = vadd.f32 0.0, %v709
    %711 = vmatmul.f32.gmra.mxu0 %v672
    %v712 = vpop.f32.mrf.mxu0
    %v713 = vadd.f32 0.0, %v712
    %714 = vmatmul.f32.gmra.mxu0 %v675
    %v715 = vpop.f32.mrf.mxu0
    %v716 = vadd.f32 0.0, %v715
    %717 = vmatmul.f32.gmra.mxu0 %v678
    %v718 = vpop.f32.mrf.mxu0
    %v719 = vadd.f32 0.0, %v718
    %720 = vmatmul.f32.gmra.mxu0 %v681
    %v721 = vpop.f32.mrf.mxu0
    %v722 = vadd.f32 0.0, %v721
    %723 = vmatmul.f32.gmra.mxu0 %v684
    %v724 = vpop.f32.mrf.mxu0
    %v725 = vadd.f32 0.0, %v724
    %726 = vdwg.mxu0
    %v727 = vmul.f32 %v631, 0.125
    %v728 = vmul.f32 %v634, 0.125
    %v729 = vmul.f32 %v637, 0.125
    %v730 = vmul.f32 %v640, 0.125
    %v731 = vmul.f32 %v643, 0.125
    %v732 = vmul.f32 %v646, 0.125
    %v733 = vmul.f32 %v649, 0.125
    %v734 = vmul.f32 %v652, 0.125
    %v735 = vmul.f32 %v704, 0.125
    %v736 = vmul.f32 %v707, 0.125
    %v737 = vmul.f32 %v710, 0.125
    %v738 = vmul.f32 %v713, 0.125
    %v739 = vmul.f32 %v716, 0.125
    %v740 = vmul.f32 %v719, 0.125
    %v741 = vmul.f32 %v722, 0.125
    %v742 = vmul.f32 %v725, 0.125
    %v743 = vmul.f32 %v727, %v727
    %v744 = vmul.f32 %v728, %v728
    %v745 = vmul.f32 %v729, %v729
    %v746 = vmul.f32 %v730, %v730
    %v747 = vmul.f32 %v731, %v731
    %v748 = vmul.f32 %v732, %v732
    %v749 = vmul.f32 %v733, %v733
    %v750 = vmul.f32 %v734, %v734
    %v751 = vsub.f32 %v735, %v743
    %v752 = vsub.f32 %v736, %v744
    %v753 = vsub.f32 %v737, %v745
    %v754 = vsub.f32 %v738, %v746
    %v755 = vsub.f32 %v739, %v747
    %v756 = vsub.f32 %v740, %v748
    %v757 = vsub.f32 %v741, %v749
    %v758 = vsub.f32 %v742, %v750
    %v759 = vmax.f32 %v751, 0.0
    %v760 = vmax.f32 %v752, 0.0
    %v761 = vmax.f32 %v753, 0.0
    %v762 = vmax.f32 %v754, 0.0
    %v763 = vmax.f32 %v755, 0.0
    %v764 = vmax.f32 %v756, 0.0
    %v765 = vmax.f32 %v757, 0.0
    %v766 = vmax.f32 %v758, 0.0
    %v767 = vadd.f32 %v759, 1e-05
    %v768 = vadd.f32 %v760, 1e-05
    %v769 = vadd.f32 %v761, 1e-05
    %v770 = vadd.f32 %v762, 1e-05
    %v771 = vadd.f32 %v763, 1e-05
    %v772 = vadd.f32 %v764, 1e-05
    %v773 = vadd.f32 %v765, 1e-05
    %v774 = vadd.f32 %v766, 1e-05
    %v775 = vrsqrt.pop %v767
    %v776 = vmul.f32 %v775, %v767
    %v777 = vmul.f32 %v776, %v775
    %v778 = vmul.f32 0.5, %v777
    %v779 = vsub.f32 1.5, %v778
    %v780 = vmul.f32 %v775, %v779
    %vm781 = vweird.f32 %v767
    %vm782 = vweird.f32 %v775
    %vm783 = vmor %vm781, %vm782
    %v784 = vsel %vm783, %v775, %v780
    %v785 = vrsqrt.pop %v768
    %v786 = vmul.f32 %v785, %v768
    %v787 = vmul.f32 %v786, %v785
    %v788 = vmul.f32 0.5, %v787
    %v789 = vsub.f32 1.5, %v788
    %v790 = vmul.f32 %v785, %v789
    %vm791 = vweird.f32 %v768
    %vm792 = vweird.f32 %v785
    %vm793 = vmor %vm791, %vm792
    %v794 = vsel %vm793, %v785, %v790
    %v795 = vrsqrt.pop %v769
    %v796 = vmul.f32 %v795, %v769
    %v797 = vmul.f32 %v796, %v795
    %v798 = vmul.f32 0.5, %v797
    %v799 = vsub.f32 1.5, %v798
    %v800 = vmul.f32 %v795, %v799
    %vm801 = vweird.f32 %v769
    %vm802 = vweird.f32 %v795
    %vm803 = vmor %vm801, %vm802
    %v804 = vsel %vm803, %v795, %v800
    %v805 = vrsqrt.pop %v770
    %v806 = vmul.f32 %v805, %v770
    %v807 = vmul.f32 %v806, %v805
    %v808 = vmul.f32 0.5, %v807
    %v809 = vsub.f32 1.5, %v808
    %v810 = vmul.f32 %v805, %v809
    %vm811 = vweird.f32 %v770
    %vm812 = vweird.f32 %v805
    %vm813 = vmor %vm811, %vm812
    %v814 = vsel %vm813, %v805, %v810
    %v815 = vrsqrt.pop %v771
    %v816 = vmul.f32 %v815, %v771
    %v817 = vmul.f32 %v816, %v815
    %v818 = vmul.f32 0.5, %v817
    %v819 = vsub.f32 1.5, %v818
    %v820 = vmul.f32 %v815, %v819
    %vm821 = vweird.f32 %v771
    %vm822 = vweird.f32 %v815
    %vm823 = vmor %vm821, %vm822
    %v824 = vsel %vm823, %v815, %v820
    %v825 = vrsqrt.pop %v772
    %v826 = vmul.f32 %v825, %v772
    %v827 = vmul.f32 %v826, %v825
    %v828 = vmul.f32 0.5, %v827
    %v829 = vsub.f32 1.5, %v828
    %v830 = vmul.f32 %v825, %v829
    %vm831 = vweird.f32 %v772
    %vm832 = vweird.f32 %v825
    %vm833 = vmor %vm831, %vm832
    %v834 = vsel %vm833, %v825, %v830
    %v835 = vrsqrt.pop %v773
    %v836 = vmul.f32 %v835, %v773
    %v837 = vmul.f32 %v836, %v835
    %v838 = vmul.f32 0.5, %v837
    %v839 = vsub.f32 1.5, %v838
    %v840 = vmul.f32 %v835, %v839
    %vm841 = vweird.f32 %v773
    %vm842 = vweird.f32 %v835
    %vm843 = vmor %vm841, %vm842
    %v844 = vsel %vm843, %v835, %v840
    %v845 = vrsqrt.pop %v774
    %v846 = vmul.f32 %v845, %v774
    %v847 = vmul.f32 %v846, %v845
    %v848 = vmul.f32 0.5, %v847
    %v849 = vsub.f32 1.5, %v848
    %v850 = vmul.f32 %v845, %v849
    %vm851 = vweird.f32 %v774
    %vm852 = vweird.f32 %v845
    %vm853 = vmor %vm851, %vm852
    %v854 = vsel %vm853, %v845, %v850
    %v855 = vmul.f32 %v573, %v784
    %v856 = vmul.f32 %v574, %v794
    %v857 = vmul.f32 %v575, %v804
    %v858 = vmul.f32 %v576, %v814
    %v859 = vmul.f32 %v577, %v824
    %v860 = vmul.f32 %v578, %v834
    %v861 = vmul.f32 %v579, %v844
    %v862 = vmul.f32 %v580, %v854
    %v863 = vmul.f32 %v727, %v855
    %v864 = vmul.f32 %v728, %v856
    %v865 = vmul.f32 %v729, %v857
    %v866 = vmul.f32 %v730, %v858
    %v867 = vmul.f32 %v731, %v859
    %v868 = vmul.f32 %v732, %v860
    %v869 = vmul.f32 %v733, %v861
    %v870 = vmul.f32 %v734, %v862
    %v871 = vsub.f32 %v581, %v863
    %v872 = vsub.f32 %v582, %v864
    %v873 = vsub.f32 %v583, %v865
    %v874 = vsub.f32 %v584, %v866
    %v875 = vsub.f32 %v585, %v867
    %v876 = vsub.f32 %v586, %v868
    %v877 = vsub.f32 %v587, %v869
    %v878 = vsub.f32 %v588, %v870
    %880 = vset.pattern.permute.xlu0 0
    %881 = vperm.xlu0 %880, %v855
    %v882 = vpop.permute.xlu0 %881
    %885 = vset.pattern.permute.xlu0 0
    %886 = vperm.xlu0 %885, %v856
    %v887 = vpop.permute.xlu0 %886
    %890 = vset.pattern.permute.xlu0 0
    %891 = vperm.xlu0 %890, %v857
    %v892 = vpop.permute.xlu0 %891
    %895 = vset.pattern.permute.xlu0 0
    %896 = vperm.xlu0 %895, %v858
    %v897 = vpop.permute.xlu0 %896
    %900 = vset.pattern.permute.xlu0 0
    %901 = vperm.xlu0 %900, %v859
    %v902 = vpop.permute.xlu0 %901
    %905 = vset.pattern.permute.xlu0 0
    %906 = vperm.xlu0 %905, %v860
    %v907 = vpop.permute.xlu0 %906
    %910 = vset.pattern.permute.xlu0 0
    %911 = vperm.xlu0 %910, %v861
    %v912 = vpop.permute.xlu0 %911
    %915 = vset.pattern.permute.xlu0 0
    %916 = vperm.xlu0 %915, %v862
    %v917 = vpop.permute.xlu0 %916
    %v919 = vmul.f32 %v565, %v882
    %v920 = vmul.f32 %v566, %v887
    %v921 = vmul.f32 %v567, %v892
    %v922 = vmul.f32 %v568, %v897
    %v923 = vmul.f32 %v569, %v902
    %v924 = vmul.f32 %v570, %v907
    %v925 = vmul.f32 %v571, %v912
    %v926 = vmul.f32 %v572, %v917
    %928 = vset.pattern.permute.xlu0 0
    %929 = vperm.xlu0 %928, %v871
    %v930 = vpop.permute.xlu0 %929
    %933 = vset.pattern.permute.xlu0 0
    %934 = vperm.xlu0 %933, %v872
    %v935 = vpop.permute.xlu0 %934
    %938 = vset.pattern.permute.xlu0 0
    %939 = vperm.xlu0 %938, %v873
    %v940 = vpop.permute.xlu0 %939
    %943 = vset.pattern.permute.xlu0 0
    %944 = vperm.xlu0 %943, %v874
    %v945 = vpop.permute.xlu0 %944
    %948 = vset.pattern.permute.xlu0 0
    %949 = vperm.xlu0 %948, %v875
    %v950 = vpop.permute.xlu0 %949
    %953 = vset.pattern.permute.xlu0 0
    %954 = vperm.xlu0 %953, %v876
    %v955 = vpop.permute.xlu0 %954
    %958 = vset.pattern.permute.xlu0 0
    %959 = vperm.xlu0 %958, %v877
    %v960 = vpop.permute.xlu0 %959
    %963 = vset.pattern.permute.xlu0 0
    %964 = vperm.xlu0 %963, %v878
    %v965 = vpop.permute.xlu0 %964
    %v967 = vadd.f32 %v919, %v930
    %v968 = vadd.f32 %v920, %v935
    %v969 = vadd.f32 %v921, %v940
    %v970 = vadd.f32 %v922, %v945
    %v971 = vadd.f32 %v923, %v950
    %v972 = vadd.f32 %v924, %v955
    %v973 = vadd.f32 %v925, %v960
    %v974 = vadd.f32 %v926, %v965
    %975 = vxpose.xlu0.b32.start [1/16] %v967, 128
    %976 = vxpose.xlu0.b32.cont [2/16] %v968, 128
    %977 = vxpose.xlu0.b32.cont [3/16] %v969, 128
    %978 = vxpose.xlu0.b32.cont [4/16] %v970, 128
    %979 = vxpose.xlu0.b32.cont [5/16] %v971, 128
    %980 = vxpose.xlu0.b32.cont [6/16] %v972, 128
    %981 = vxpose.xlu0.b32.cont [7/16] %v973, 128
    %982 = vxpose.xlu0.b32.cont [8/16] %v974, 128
    %983 = vxpose.xlu0.b32.cont [9/16] 0.0, 128
    %984 = vxpose.xlu0.b32.cont [10/16] 0.0, 128
    %985 = vxpose.xlu0.b32.cont [11/16] 0.0, 128
    %986 = vxpose.xlu0.b32.cont [12/16] 0.0, 128
    %987 = vxpose.xlu0.b32.cont [13/16] 0.0, 128
    %988 = vxpose.xlu0.b32.cont [14/16] 0.0, 128
    %989 = vxpose.xlu0.b32.cont [15/16] 0.0, 128
    %990 = vxpose.xlu0.b32.end [16/16] 0.0, 128
    %v991 = vpop.trf.xlu0
    %v992 = vpop.trf.xlu0
    %v993 = vpop.trf.xlu0
    %v994 = vpop.trf.xlu0
    %v995 = vpop.trf.xlu0
    %v996 = vpop.trf.xlu0
    %v997 = vpop.trf.xlu0
    %v998 = vpop.trf.xlu0
    %v999 = vpop.trf.xlu0
    %v1000 = vpop.trf.xlu0
    %v1001 = vpop.trf.xlu0
    %v1002 = vpop.trf.xlu0
    %v1003 = vpop.trf.xlu0
    %v1004 = vpop.trf.xlu0
    %v1005 = vpop.trf.xlu0
    %v1006 = vpop.trf.xlu0
    %vm1007 = vcmask 523264
    %v1009 = vsel %vm1007, %v991, 0
    %v1012 = vsel %vm1007, %v30, 0
    %v1015 = vsel %vm1007, %v31, 0
    %v1018 = vsel %vm1007, %v32, 0
    %v1021 = vsel %vm1007, %v33, 0
    %v1024 = vsel %vm1007, %v34, 0
    %v1027 = vsel %vm1007, %v35, 0
    %v1030 = vsel %vm1007, %v36, 0
    %v1033 = vsel %vm1007, %v37, 0
    %v1036 = vsel %vm1007, %v38, 0
    %v1039 = vsel %vm1007, %v39, 0
    %v1042 = vsel %vm1007, %v40, 0
    %v1045 = vsel %vm1007, %v41, 0
    %v1048 = vsel %vm1007, %v42, 0
    %v1051 = vsel %vm1007, %v43, 0
    %v1054 = vsel %vm1007, %v44, 0
    %v1057 = vsel %vm1007, %v45, 0
    %1059 = vmatpush.xpose.msra.mxu0 %v1057
    %1060 = vmatpush.xpose.msra.mxu0 %v1054
    %1061 = vmatpush.xpose.msra.mxu0 %v1051
    %1062 = vmatpush.xpose.msra.mxu0 %v1048
    %1063 = vmatpush.xpose.msra.mxu0 %v1045
    %1064 = vmatpush.xpose.msra.mxu0 %v1042
    %1065 = vmatpush.xpose.msra.mxu0 %v1039
    %1066 = vmatpush.xpose.msra.mxu0 %v1036
    %1067 = vmatpush.xpose.msra.mxu0 %v1033
    %1068 = vmatpush.xpose.msra.mxu0 %v1030
    %1069 = vmatpush.xpose.msra.mxu0 %v1027
    %1070 = vmatpush.xpose.msra.mxu0 %v1024
    %1071 = vmatpush.xpose.msra.mxu0 %v1021
    %1072 = vmatpush.xpose.msra.mxu0 %v1018
    %1073 = vmatpush.xpose.msra.mxu0 %v1015
    %1074 = vmatpush.xpose.msra.mxu0 %v1012
    %1075 = vmatmul.f32.gmra.mxu0 %v1009
    %v1076 = vpop.f32.mrf.mxu0
    %v1077 = vadd.f32 0.0, %v1076
    %1078 = vdwg.mxu0
    %1079 = vst [vmem:[#allocation2] sm:$0xff] %v1077
    // Predicated region
    $region14: #{tpu_custom_call.1} parent=1 // pred_check
      _
    $region15: #{tpu_custom_call.1} parent=1 // pred_check_branch
      %1081 = sbr.rel (0) target = $region17
    $region16: #{tpu_custom_call.1} parent=1 // pred_region
      %1083 = vsyncadd [#allocation3], 0
      %s1085 = sshll.u32 [#allocation2], 4
      %s1086 = int_to_ptr.vmem [resolvable:$true] %s1085
      %s1087 = sshll.u32 %s3, 4
      %s1088 = int_to_ptr.hbm [resolvable:$true] %s1087
      %1090 = dma.vmem_to_hbm [thread:$0]  %s1086, 128, %s1088, [#allocation3]
    $region17: #{tpu_custom_call.1} parent=1 // pred_fallthru
      _
    // Predicated region
    $region18: #{tpu_custom_call.1} parent=1 // pred_check
      _
    $region19: #{tpu_custom_call.1} parent=1 // pred_check_branch
      %1092 = sbr.rel (0) target = $region21
    $region20: #{tpu_custom_call.1} parent=1 // pred_region
      %1094 = dma.done [#allocation3], 128
    $region21: #{tpu_custom_call.1} parent=1 // pred_fallthru
      _
    %1095 = vsyncpa [#allocation3], 1

</llo_original>
